<compile_context>
chip_gen: v7x
topology: tpu7x:2x2x1
jax: 0.10.0
libtpu: 0.0.40
codegen_flags: <defaults>
</compile_context>

<pallas_src>
import functools

import jax
import jax.numpy as jnp
from jax.experimental import pallas as pl
from jax.experimental.pallas import tpu as pltpu


# ----------------------------------------------------------------------------
# Kernel
# ----------------------------------------------------------------------------
def subnet_kernel(x_ref, w_ref, b_ref, out_ref, *, in_p, h_p, c_p):
    """Fused 3x(matmul+tanh) + output matmul for one batch tile.

    x_ref   : (TB, in_p)                          current batch tile
    w_ref   : (in_p + 3*h_p, max(h_p, c_p))       packed weight slab (resident)
    b_ref   : (8, max(h_p, c_p))                  packed bias rows   (resident)
    out_ref : (TB, c_p)                           lane-dense output tile
    """
    o1 = in_p
    o2 = o1 + h_p
    o3 = o2 + h_p

    x = x_ref[...]

    h = jnp.tanh(
        jnp.dot(x, w_ref[0:o1, 0:h_p], preferred_element_type=jnp.float32)
        + b_ref[0:1, 0:h_p])
    h = jnp.tanh(
        jnp.dot(h, w_ref[o1:o2, 0:h_p], preferred_element_type=jnp.float32)
        + b_ref[1:2, 0:h_p])
    h = jnp.tanh(
        jnp.dot(h, w_ref[o2:o3, 0:h_p], preferred_element_type=jnp.float32)
        + b_ref[2:3, 0:h_p])
    pred = (
        jnp.dot(h, w_ref[o3:o3 + h_p, 0:c_p], preferred_element_type=jnp.float32)
        + b_ref[3:4, 0:c_p])

    out_ref[...] = pred.astype(out_ref.dtype)


# ----------------------------------------------------------------------------
# Wrapper
# ----------------------------------------------------------------------------
def _round_up(n, m):
    return ((n + m - 1) // m) * m


def _pad2d(a, rows, cols):
    return jnp.pad(a, ((0, rows - a.shape[0]), (0, cols - a.shape[1])))


def subnet_forward(x, params, *, batch_tile=None):
    """x: (batch, in_size) f32.  params: transposed weights (in,out) + (1,out) biases."""
    w1, b1, w2, b2, w3, b3, wo, bo = params
    batch, in_size = x.shape
    hidden = w1.shape[1]
    n_class = wo.shape[1]

    # Pad feature dims to full 128-lane width (MXU / lane-dense stores).
    in_p = _round_up(in_size, 128)
    h_p = _round_up(hidden, 128)
    c_p = _round_up(n_class, 128)
    w_cols = max(h_p, c_p)

    # Batch tile: multiple of 8 sublanes; large tiles amortize grid overhead.
    if batch_tile is None:
        batch_tile = 256 if batch >= 256 else _round_up(batch, 8)
    tb = batch_tile
    b_p = _round_up(batch, tb)

    # Pack all weights into one lane-dense slab (single DMA, VMEM-resident).
    wpack = jnp.concatenate(
        [
            _pad2d(w1, in_p, w_cols),
            _pad2d(w2, h_p, w_cols),
            _pad2d(w3, h_p, w_cols),
            _pad2d(wo, h_p, w_cols),
        ],
        axis=0,
    )
    # Pack biases into one (8, w_cols) slab (rows 0..3 used, rest zero) so the
    # block shape is trivially (8,128)-aligned.  NOTE: write biases with their
    # TRUE (unpadded) column extents; padded lanes must stay zero.
    bpack = jnp.zeros((8, w_cols), jnp.float32)
    bpack = bpack.at[0, :hidden].set(b1.reshape(-1))
    bpack = bpack.at[1, :hidden].set(b2.reshape(-1))
    bpack = bpack.at[2, :hidden].set(b3.reshape(-1))
    bpack = bpack.at[3, :n_class].set(bo.reshape(-1))

    x_p = _pad2d(x, b_p, in_p)

    kernel = functools.partial(subnet_kernel, in_p=in_p, h_p=h_p, c_p=c_p)

    flops = 2 * b_p * (in_p * h_p + 2 * h_p * h_p + h_p * c_p)
    bytes_accessed = 4 * (x_p.size + wpack.size + bpack.size + b_p * c_p)
    cost = pl.CostEstimate(
        flops=flops,
        transcendentals=3 * b_p * h_p,
        bytes_accessed=bytes_accessed,
    )

    out_p = pl.pallas_call(
        kernel,
        out_shape=jax.ShapeDtypeStruct((b_p, c_p), jnp.float32),
        grid=(b_p // tb,),
        in_specs=[
            # x: blocked along batch, double-buffered by the pipeline.
            pl.BlockSpec((tb, in_p), lambda i: (i, 0)),
            # Packed weights / biases: full array, constant block index
            # -> DMA'd once, resident across all grid steps.
            pl.BlockSpec(wpack.shape, lambda i: (0, 0)),
            pl.BlockSpec(bpack.shape, lambda i: (0, 0)),
        ],
        out_specs=pl.BlockSpec((tb, c_p), lambda i: (i, 0)),
        compiler_params=pltpu.CompilerParams(
            dimension_semantics=("parallel",),
        ),
        cost_estimate=cost,
    )(x_p, wpack, bpack)

    # Strip batch / class padding.
    return out_p[:batch, :n_class]


# ----------------------------------------------------------------------------
# Params (PyTorch-style init) and pure-JAX reference
# ----------------------------------------------------------------------------
def init_params(key, in_size, hidden_size, n_class):
    """uniform(-1/sqrt(fan_in), 1/sqrt(fan_in)); weights stored as (in, out)."""
    def linear(k, fan_in, fan_out):
        kw, kb = jax.random.split(k)
        bound = 1.0 / jnp.sqrt(float(fan_in))
        w = jax.random.uniform(kw, (fan_in, fan_out), jnp.float32, -bound, bound)
        b = jax.random.uniform(kb, (1, fan_out), jnp.float32, -bound, bound)
        return w, b

    k1, k2, k3, k4 = jax.random.split(key, 4)
    w1, b1 = linear(k1, in_size, hidden_size)      # linear_project1
    w2, b2 = linear(k2, hidden_size, hidden_size)  # linear_project2
    w3, b3 = linear(k3, hidden_size, hidden_size)  # linear_project3
    wo, bo = linear(k4, hidden_size, n_class)      # linear_out
    # linear_project_fusion is unused in forward() and not materialized.
    return (w1, b1, w2, b2, w3, b3, wo, bo)


def subnet_reference(x, params):
    w1, b1, w2, b2, w3, b3, wo, bo = params
    h = jnp.tanh(x @ w1 + b1)
    h = jnp.tanh(h @ w2 + b2)
    h = jnp.tanh(h @ w3 + b3)
    return h @ wo + bo


# ----------------------------------------------------------------------------
# Test
# ----------------------------------------------------------------------------
if __name__ == "__main__":
    batch, in_size, hidden_size, n_class = 2, 16, 32, 4

    key = jax.random.PRNGKey(0)
    kx, kf, kp = jax.random.split(key, 3)

    complete_input = jax.random.normal(kx, (batch, in_size), jnp.float32)
    # fusion_feature is accepted by the PyTorch forward but never used.
    fusion_feature = jax.random.normal(kf, (batch, hidden_size), jnp.float32)

    params = init_params(kp, in_size, hidden_size, n_class)

    pred = subnet_forward(complete_input, params)
    pred = jax.block_until_ready(pred)

    ref = subnet_reference(complete_input, params)
    assert pred.shape == (batch, n_class)
    assert jnp.allclose(pred, ref, atol=1e-5, rtol=1e-5), "mismatch vs reference"

    print("KERNEL_OK")
</pallas_src>

<mosaic_0001>
module attributes {stable_mosaic.version = 11 : i64} {
  func.func @subnet_kernel(%arg0: i32, %arg1: memref<8x128xf32, #tpu.memory_space<vmem>>, %arg2: memref<512x128xf32, #tpu.memory_space<vmem>>, %arg3: memref<8x128xf32, #tpu.memory_space<vmem>>, %arg4: memref<8x128xf32, #tpu.memory_space<vmem>>) attributes {dimension_semantics = [#tpu.dimension_semantics<parallel>], iteration_bounds = array<i64: 1>, scalar_prefetch = 0 : i64, scratch_operands = 0 : i64, tpu.core_type = #tpu.core_type<tc>, window_params = [{transform_indices = @transform_0, window_bounds = array<i64: 8, 128>}, {pipeline_mode = #tpu.pipeline_mode<synchronous>, transform_indices = @transform_1, window_bounds = array<i64: 512, 128>}, {pipeline_mode = #tpu.pipeline_mode<synchronous>, transform_indices = @transform_2, window_bounds = array<i64: 8, 128>}, {transform_indices = @transform_3, window_bounds = array<i64: 8, 128>}]} {
    %c0 = arith.constant 0 : index
    %c0_0 = arith.constant 0 : index
    %0 = vector.load %arg1[%c0, %c0_0] : memref<8x128xf32, #tpu.memory_space<vmem>>, vector<8x128xf32>
    %c0_1 = arith.constant 0 : index
    %c0_2 = arith.constant 0 : index
    %1 = vector.load %arg2[%c0_1, %c0_2] : memref<512x128xf32, #tpu.memory_space<vmem>>, vector<128x128xf32>
    %cst = arith.constant dense<0.000000e+00> : vector<8x128xf32>
    %2 = tpu.matmul %0, %1, %cst {dimension_numbers = #tpu.dot_dimension_numbers<[1], [0], [0], [1], [0, 0, 1, 1], [], []>} : vector<8x128xf32>, vector<128x128xf32>, vector<8x128xf32> -> vector<8x128xf32>
    %c0_3 = arith.constant 0 : index
    %c0_4 = arith.constant 0 : index
    %3 = vector.load %arg3[%c0_3, %c0_4] : memref<8x128xf32, #tpu.memory_space<vmem>>, vector<1x128xf32>
    %4 = vector.broadcast %3 : vector<1x128xf32> to vector<8x128xf32>
    %5 = arith.addf %2, %4 : vector<8x128xf32>
    %6 = math.tanh %5 : vector<8x128xf32>
    %c128 = arith.constant 128 : index
    %c0_5 = arith.constant 0 : index
    %7 = vector.load %arg2[%c128, %c0_5] : memref<512x128xf32, #tpu.memory_space<vmem>>, vector<128x128xf32>
    %cst_6 = arith.constant dense<0.000000e+00> : vector<8x128xf32>
    %8 = tpu.matmul %6, %7, %cst_6 {dimension_numbers = #tpu.dot_dimension_numbers<[1], [0], [0], [1], [0, 0, 1, 1], [], []>} : vector<8x128xf32>, vector<128x128xf32>, vector<8x128xf32> -> vector<8x128xf32>
    %c1 = arith.constant 1 : index
    %c0_7 = arith.constant 0 : index
    %9 = vector.load %arg3[%c1, %c0_7] : memref<8x128xf32, #tpu.memory_space<vmem>>, vector<1x128xf32>
    %10 = vector.broadcast %9 : vector<1x128xf32> to vector<8x128xf32>
    %11 = arith.addf %8, %10 : vector<8x128xf32>
    %12 = math.tanh %11 : vector<8x128xf32>
    %c256 = arith.constant 256 : index
    %c0_8 = arith.constant 0 : index
    %13 = vector.load %arg2[%c256, %c0_8] : memref<512x128xf32, #tpu.memory_space<vmem>>, vector<128x128xf32>
    %cst_9 = arith.constant dense<0.000000e+00> : vector<8x128xf32>
    %14 = tpu.matmul %12, %13, %cst_9 {dimension_numbers = #tpu.dot_dimension_numbers<[1], [0], [0], [1], [0, 0, 1, 1], [], []>} : vector<8x128xf32>, vector<128x128xf32>, vector<8x128xf32> -> vector<8x128xf32>
    %c2 = arith.constant 2 : index
    %c0_10 = arith.constant 0 : index
    %15 = vector.load %arg3[%c2, %c0_10] : memref<8x128xf32, #tpu.memory_space<vmem>>, vector<1x128xf32>
    %16 = vector.broadcast %15 : vector<1x128xf32> to vector<8x128xf32>
    %17 = arith.addf %14, %16 : vector<8x128xf32>
    %18 = math.tanh %17 : vector<8x128xf32>
    %c384 = arith.constant 384 : index
    %c0_11 = arith.constant 0 : index
    %19 = vector.load %arg2[%c384, %c0_11] : memref<512x128xf32, #tpu.memory_space<vmem>>, vector<128x128xf32>
    %cst_12 = arith.constant dense<0.000000e+00> : vector<8x128xf32>
    %20 = tpu.matmul %18, %19, %cst_12 {dimension_numbers = #tpu.dot_dimension_numbers<[1], [0], [0], [1], [0, 0, 1, 1], [], []>} : vector<8x128xf32>, vector<128x128xf32>, vector<8x128xf32> -> vector<8x128xf32>
    %c3 = arith.constant 3 : index
    %c0_13 = arith.constant 0 : index
    %21 = vector.load %arg3[%c3, %c0_13] : memref<8x128xf32, #tpu.memory_space<vmem>>, vector<1x128xf32>
    %22 = vector.broadcast %21 : vector<1x128xf32> to vector<8x128xf32>
    %23 = arith.addf %20, %22 : vector<8x128xf32>
    %c0_14 = arith.constant 0 : index
    %c0_15 = arith.constant 0 : index
    %24 = vector.load %arg4[%c0_14, %c0_15] : memref<8x128xf32, #tpu.memory_space<vmem>>, vector<8x128xf32>
    tpu.vector_store %arg4[%c0_14, %c0_15], %23 {strides = array<i32>} : memref<8x128xf32, #tpu.memory_space<vmem>>, vector<8x128xf32>,
    return
  }
  func.func @transform_0(%arg0: i32) -> (i32, i32) {
    %c0_i32 = arith.constant 0 : i32
    %c0_i32_0 = arith.constant 0 : i32
    return %arg0, %c0_i32 : i32, i32
  }
  func.func @transform_1(%arg0: i32) -> (i32, i32) {
    %c0_i32 = arith.constant 0 : i32
    %c0_i32_0 = arith.constant 0 : i32
    %c0_i32_1 = arith.constant 0 : i32
    return %c0_i32, %c0_i32_0 : i32, i32
  }
  func.func @transform_2(%arg0: i32) -> (i32, i32) {
    %c0_i32 = arith.constant 0 : i32
    %c0_i32_0 = arith.constant 0 : i32
    %c0_i32_1 = arith.constant 0 : i32
    return %c0_i32, %c0_i32_0 : i32, i32
  }
  func.func @transform_3(%arg0: i32) -> (i32, i32) {
    %c0_i32 = arith.constant 0 : i32
    %c0_i32_0 = arith.constant 0 : i32
    return %arg0, %c0_i32 : i32, i32
  }
}

</mosaic_0001>

<llo_original>
// kernel: tpu_custom_call.1
$region0: #{tpu_custom_call.1}
  #allocation0 [shape = 'u32[]', space=smem, size = 0x4, offset = 0x4, fixed_abs, tag = 'smem constant byte address 0x4 - core index']
  #allocation1 [shape = 'u32[144,128]{1,0:T(1,128)}', space=vmem, size = 0x12000, scoped, tag = 'internal scratch']
  %s0 = inlined_call_operand.hbm [shape: f32[8,128], index: 0, kind: input, shape index: {}]
  %s1 = inlined_call_operand.hbm [shape: f32[512,128], index: 1, kind: input, shape index: {}]
  %s2 = inlined_call_operand.hbm [shape: f32[8,128], index: 2, kind: input, shape index: {}]
  %s3 = inlined_call_operand.hbm [shape: f32[8,128], index: 3, kind: output, shape index: {}]
  %s4 = sld [smem:[#allocation0]]
  $region34: #{tpu_custom_call.1} parent=0
    _
  %s6 = ssub.s32 1, %s4
  %s7 = scalar_select 0, %s6, %s4
  $region1: #{tpu_custom_call.1} parent=0
    #allocation2 [shape = 'u8[4096]{0}', space=vmem, size = 0x1000, scoped, tag = 'input window, operand 0, single buffered']
    #allocation3 [shape = 's32[1]{0}', space=sflag, size = 0x4, scoped, tag = 'scoped memory for tpu_custom_call.1']
    #allocation4 [shape = 's32[1]{0}', space=sflag, size = 0x4, scoped, tag = 'scoped memory for tpu_custom_call.1']
    #allocation5 [shape = 'u8[262144]{0}', space=vmem, size = 0x40000, scoped, tag = 'input window, operand 1, single buffered']
    #allocation6 [shape = 's32[1]{0}', space=sflag, size = 0x4, scoped, tag = 'scoped memory for tpu_custom_call.1']
    #allocation7 [shape = 'u8[4096]{0}', space=vmem, size = 0x1000, scoped, tag = 'input window, operand 2, single buffered']
    #allocation8 [shape = 'u8[4096]{0}', space=vmem, size = 0x1000, scoped, tag = 'output window, operand 0, single buffered']
    %8 = vsyncpa [#allocation3], 0
    %9 = vsyncpa [#allocation6], 0
    %10 = vsyncpa [#allocation4], 0
    // Predicated region
    $region2: #{tpu_custom_call.1} parent=1 // pred_check
      _
    $region3: #{tpu_custom_call.1} parent=1 // pred_check_branch
      %12 = sbr.rel (0) target = $region5
    $region4: #{tpu_custom_call.1} parent=1 // pred_region
      %s14 = ssub.s32 128, 128
      %15 = vsyncadd [#allocation3], %s14
      %s17 = sshll.u32 [#allocation2], 4
      %s18 = int_to_ptr.vmem [resolvable:$true] %s17
      %20 = dma.hbm_to_vmem [thread:$0]  %s0, 128, %s18, [#allocation3]
    $region5: #{tpu_custom_call.1} parent=1 // pred_fallthru
      _
    // Predicated region
    $region6: #{tpu_custom_call.1} parent=1 // pred_check
      _
    $region7: #{tpu_custom_call.1} parent=1 // pred_check_branch
      %22 = sbr.rel (0) target = $region9
    $region8: #{tpu_custom_call.1} parent=1 // pred_region
      %s24 = ssub.s32 8192, 8192
      %25 = vsyncadd [#allocation6], %s24
      %s26 = sshll.u32 [#allocation5], 4
      %s27 = int_to_ptr.vmem [resolvable:$true] %s26
      %32 = dma.hbm_to_vmem [thread:$0]  %s1, 8192, %s27, [#allocation6], 128, 128, 8
    $region9: #{tpu_custom_call.1} parent=1 // pred_fallthru
      _
    // Predicated region
    $region10: #{tpu_custom_call.1} parent=1 // pred_check
      _
    $region11: #{tpu_custom_call.1} parent=1 // pred_check_branch
      %34 = sbr.rel (0) target = $region13
    $region12: #{tpu_custom_call.1} parent=1 // pred_region
      %s36 = ssub.s32 128, 128
      %37 = vsyncadd [#allocation6], %s36
      %s39 = sshll.u32 [#allocation7], 4
      %s40 = int_to_ptr.vmem [resolvable:$true] %s39
      %42 = dma.hbm_to_vmem [thread:$0]  %s2, 128, %s40, [#allocation6]
    $region13: #{tpu_custom_call.1} parent=1 // pred_fallthru
      _
    // Predicated region
    $region14: #{tpu_custom_call.1} parent=1 // pred_check
      _
    $region15: #{tpu_custom_call.1} parent=1 // pred_check_branch
      %44 = sbr.rel (0) target = $region17
    $region16: #{tpu_custom_call.1} parent=1 // pred_region
      %45 = dma.done [#allocation3], 128
    $region17: #{tpu_custom_call.1} parent=1 // pred_fallthru
      _
    // Predicated region
    $region18: #{tpu_custom_call.1} parent=1 // pred_check
      _
    $region19: #{tpu_custom_call.1} parent=1 // pred_check_branch
      %47 = sbr.rel (0) target = $region21
    $region20: #{tpu_custom_call.1} parent=1 // pred_region
      %48 = dma.done [#allocation6], 8192
    $region21: #{tpu_custom_call.1} parent=1 // pred_fallthru
      _
    // Predicated region
    $region22: #{tpu_custom_call.1} parent=1 // pred_check
      _
    $region23: #{tpu_custom_call.1} parent=1 // pred_check_branch
      %50 = sbr.rel (0) target = $region25
    $region24: #{tpu_custom_call.1} parent=1 // pred_region
      %51 = dma.done [#allocation6], 128
    $region25: #{tpu_custom_call.1} parent=1 // pred_fallthru
      _
    %v52 = vld [vmem:[#allocation2] sm:$0xff]
    %v53 = vld [vmem:[#allocation5] sm:$0xff]
    %v54 = vld [vmem:[#allocation5 + $0x8] sm:$0xff]
    %v55 = vld [vmem:[#allocation5 + $0x10] sm:$0xff]
    %v56 = vld [vmem:[#allocation5 + $0x18] sm:$0xff]
    %v57 = vld [vmem:[#allocation5 + $0x20] sm:$0xff]
    %v58 = vld [vmem:[#allocation5 + $0x28] sm:$0xff]
    %v59 = vld [vmem:[#allocation5 + $0x30] sm:$0xff]
    %v60 = vld [vmem:[#allocation5 + $0x38] sm:$0xff]
    %v61 = vld [vmem:[#allocation5 + $0x40] sm:$0xff]
    %v62 = vld [vmem:[#allocation5 + $0x48] sm:$0xff]
    %v63 = vld [vmem:[#allocation5 + $0x50] sm:$0xff]
    %v64 = vld [vmem:[#allocation5 + $0x58] sm:$0xff]
    %v65 = vld [vmem:[#allocation5 + $0x60] sm:$0xff]
    %v66 = vld [vmem:[#allocation5 + $0x68] sm:$0xff]
    %v67 = vld [vmem:[#allocation5 + $0x70] sm:$0xff]
    %v68 = vld [vmem:[#allocation5 + $0x78] sm:$0xff]
    %v69 = vld [vmem:[#allocation7] sm:$0x1]
    %v70 = vlaneseq
    %v71 = vshrl.u32 %v70, 7
    %v72 = vsub.s32 0, %v71
    %v73 = vrot.slane %v69, %v72
    %74 = vmatprep.subr.mxu0 0.0
    %75 = vmatpush1.msra.mxu0 %v53
    %76 = vmatprep.subr.mxu0 0.0
    %77 = vmatpush1.msra.mxu0 %v54
    %78 = vmatprep.subr.mxu0 0.0
    %79 = vmatpush1.msra.mxu0 %v55
    %80 = vmatprep.subr.mxu0 0.0
    %81 = vmatpush1.msra.mxu0 %v56
    %82 = vmatprep.subr.mxu0 0.0
    %83 = vmatpush1.msra.mxu0 %v57
    %84 = vmatprep.subr.mxu0 0.0
    %85 = vmatpush1.msra.mxu0 %v58
    %86 = vmatprep.subr.mxu0 0.0
    %87 = vmatpush1.msra.mxu0 %v59
    %88 = vmatprep.subr.mxu0 0.0
    %89 = vmatpush1.msra.mxu0 %v60
    %90 = vmatprep.subr.mxu0 0.0
    %91 = vmatpush1.msra.mxu0 %v61
    %92 = vmatprep.subr.mxu0 0.0
    %93 = vmatpush1.msra.mxu0 %v62
    %94 = vmatprep.subr.mxu0 0.0
    %95 = vmatpush1.msra.mxu0 %v63
    %96 = vmatprep.subr.mxu0 0.0
    %97 = vmatpush1.msra.mxu0 %v64
    %98 = vmatprep.subr.mxu0 0.0
    %99 = vmatpush1.msra.mxu0 %v65
    %100 = vmatprep.subr.mxu0 0.0
    %101 = vmatpush1.msra.mxu0 %v66
    %102 = vmatprep.subr.mxu0 0.0
    %103 = vmatpush1.msra.mxu0 %v67
    %104 = vmatprep.subr.mxu0 0.0
    %105 = vmatpush1.msra.mxu0 %v68
    %106 = vmatprep.subr.mxu0 0.0
    %107 = vmatpush1.msra.mxu0 0.0
    %108 = vmatprep.subr.mxu0 0.0
    %109 = vmatpush1.msra.mxu0 0.0
    %110 = vmatprep.subr.mxu0 0.0
    %111 = vmatpush1.msra.mxu0 0.0
    %112 = vmatprep.subr.mxu0 0.0
    %113 = vmatpush1.msra.mxu0 0.0
    %114 = vmatprep.subr.mxu0 0.0
    %115 = vmatpush1.msra.mxu0 0.0
    %116 = vmatprep.subr.mxu0 0.0
    %117 = vmatpush1.msra.mxu0 0.0
    %118 = vmatprep.subr.mxu0 0.0
    %119 = vmatpush1.msra.mxu0 0.0
    %120 = vmatprep.subr.mxu0 0.0
    %121 = vmatpush1.msra.mxu0 0.0
    %122 = vmatprep.subr.mxu0 0.0
    %123 = vmatpush1.msra.mxu0 0.0
    %124 = vmatprep.subr.mxu0 0.0
    %125 = vmatpush1.msra.mxu0 0.0
    %126 = vmatprep.subr.mxu0 0.0
    %127 = vmatpush1.msra.mxu0 0.0
    %128 = vmatprep.subr.mxu0 0.0
    %129 = vmatpush1.msra.mxu0 0.0
    %130 = vmatprep.subr.mxu0 0.0
    %131 = vmatpush1.msra.mxu0 0.0
    %132 = vmatprep.subr.mxu0 0.0
    %133 = vmatpush1.msra.mxu0 0.0
    %134 = vmatprep.subr.mxu0 0.0
    %135 = vmatpush1.msra.mxu0 0.0
    %136 = vmatprep.subr.mxu0 0.0
    %137 = vmatpush1.msra.mxu0 0.0
    %138 = vmatprep.mubr.f32.mxu0 0.0
    %139 = vmatmul.mubr.f32.gmra.mrb[0].mxu0 %v52
    %v140 = vpop.f32.mrb[0].mxu0
    %v141 = vadd.f32 %v73, %v140
    %v142 = vpop.f32.mrb[0].mxu0
    %143 = vdwg.mxu0
    %v144 = vtanh.pop %v141
    %v145 = vld [vmem:[#allocation5 + $0x80] sm:$0xff]
    %v146 = vld [vmem:[#allocation5 + $0x88] sm:$0xff]
    %v147 = vld [vmem:[#allocation5 + $0x90] sm:$0xff]
    %v148 = vld [vmem:[#allocation5 + $0x98] sm:$0xff]
    %v149 = vld [vmem:[#allocation5 + $0xa0] sm:$0xff]
    %v150 = vld [vmem:[#allocation5 + $0xa8] sm:$0xff]
    %v151 = vld [vmem:[#allocation5 + $0xb0] sm:$0xff]
    %v152 = vld [vmem:[#allocation5 + $0xb8] sm:$0xff]
    %v153 = vld [vmem:[#allocation5 + $0xc0] sm:$0xff]
    %v154 = vld [vmem:[#allocation5 + $0xc8] sm:$0xff]
    %v155 = vld [vmem:[#allocation5 + $0xd0] sm:$0xff]
    %v156 = vld [vmem:[#allocation5 + $0xd8] sm:$0xff]
    %v157 = vld [vmem:[#allocation5 + $0xe0] sm:$0xff]
    %v158 = vld [vmem:[#allocation5 + $0xe8] sm:$0xff]
    %v159 = vld [vmem:[#allocation5 + $0xf0] sm:$0xff]
    %v160 = vld [vmem:[#allocation5 + $0xf8] sm:$0xff]
    %v161 = vld [vmem:[#allocation7 + $0x1] sm:$0x1]
    %v162 = vlaneseq
    %v163 = vshrl.u32 %v162, 7
    %v164 = vsub.s32 0, %v163
    %v165 = vrot.slane %v161, %v164
    %166 = vmatprep.subr.mxu0 0.0
    %167 = vmatpush1.msra.mxu0 %v145
    %168 = vmatprep.subr.mxu0 0.0
    %169 = vmatpush1.msra.mxu0 %v146
    %170 = vmatprep.subr.mxu0 0.0
    %171 = vmatpush1.msra.mxu0 %v147
    %172 = vmatprep.subr.mxu0 0.0
    %173 = vmatpush1.msra.mxu0 %v148
    %174 = vmatprep.subr.mxu0 0.0
    %175 = vmatpush1.msra.mxu0 %v149
    %176 = vmatprep.subr.mxu0 0.0
    %177 = vmatpush1.msra.mxu0 %v150
    %178 = vmatprep.subr.mxu0 0.0
    %179 = vmatpush1.msra.mxu0 %v151
    %180 = vmatprep.subr.mxu0 0.0
    %181 = vmatpush1.msra.mxu0 %v152
    %182 = vmatprep.subr.mxu0 0.0
    %183 = vmatpush1.msra.mxu0 %v153
    %184 = vmatprep.subr.mxu0 0.0
    %185 = vmatpush1.msra.mxu0 %v154
    %186 = vmatprep.subr.mxu0 0.0
    %187 = vmatpush1.msra.mxu0 %v155
    %188 = vmatprep.subr.mxu0 0.0
    %189 = vmatpush1.msra.mxu0 %v156
    %190 = vmatprep.subr.mxu0 0.0
    %191 = vmatpush1.msra.mxu0 %v157
    %192 = vmatprep.subr.mxu0 0.0
    %193 = vmatpush1.msra.mxu0 %v158
    %194 = vmatprep.subr.mxu0 0.0
    %195 = vmatpush1.msra.mxu0 %v159
    %196 = vmatprep.subr.mxu0 0.0
    %197 = vmatpush1.msra.mxu0 %v160
    %198 = vmatprep.subr.mxu0 0.0
    %199 = vmatpush1.msra.mxu0 0.0
    %200 = vmatprep.subr.mxu0 0.0
    %201 = vmatpush1.msra.mxu0 0.0
    %202 = vmatprep.subr.mxu0 0.0
    %203 = vmatpush1.msra.mxu0 0.0
    %204 = vmatprep.subr.mxu0 0.0
    %205 = vmatpush1.msra.mxu0 0.0
    %206 = vmatprep.subr.mxu0 0.0
    %207 = vmatpush1.msra.mxu0 0.0
    %208 = vmatprep.subr.mxu0 0.0
    %209 = vmatpush1.msra.mxu0 0.0
    %210 = vmatprep.subr.mxu0 0.0
    %211 = vmatpush1.msra.mxu0 0.0
    %212 = vmatprep.subr.mxu0 0.0
    %213 = vmatpush1.msra.mxu0 0.0
    %214 = vmatprep.subr.mxu0 0.0
    %215 = vmatpush1.msra.mxu0 0.0
    %216 = vmatprep.subr.mxu0 0.0
    %217 = vmatpush1.msra.mxu0 0.0
    %218 = vmatprep.subr.mxu0 0.0
    %219 = vmatpush1.msra.mxu0 0.0
    %220 = vmatprep.subr.mxu0 0.0
    %221 = vmatpush1.msra.mxu0 0.0
    %222 = vmatprep.subr.mxu0 0.0
    %223 = vmatpush1.msra.mxu0 0.0
    %224 = vmatprep.subr.mxu0 0.0
    %225 = vmatpush1.msra.mxu0 0.0
    %226 = vmatprep.subr.mxu0 0.0
    %227 = vmatpush1.msra.mxu0 0.0
    %228 = vmatprep.subr.mxu0 0.0
    %229 = vmatpush1.msra.mxu0 0.0
    %230 = vmatprep.mubr.f32.mxu0 0.0
    %231 = vmatmul.mubr.f32.gmra.mrb[0].mxu0 %v144
    %v232 = vpop.f32.mrb[0].mxu0
    %v233 = vadd.f32 %v165, %v232
    %v234 = vpop.f32.mrb[0].mxu0
    %235 = vdwg.mxu0
    %v236 = vtanh.pop %v233
    %v237 = vld [vmem:[#allocation5 + $0x100] sm:$0xff]
    %v238 = vld [vmem:[#allocation5 + $0x108] sm:$0xff]
    %v239 = vld [vmem:[#allocation5 + $0x110] sm:$0xff]
    %v240 = vld [vmem:[#allocation5 + $0x118] sm:$0xff]
    %v241 = vld [vmem:[#allocation5 + $0x120] sm:$0xff]
    %v242 = vld [vmem:[#allocation5 + $0x128] sm:$0xff]
    %v243 = vld [vmem:[#allocation5 + $0x130] sm:$0xff]
    %v244 = vld [vmem:[#allocation5 + $0x138] sm:$0xff]
    %v245 = vld [vmem:[#allocation5 + $0x140] sm:$0xff]
    %v246 = vld [vmem:[#allocation5 + $0x148] sm:$0xff]
    %v247 = vld [vmem:[#allocation5 + $0x150] sm:$0xff]
    %v248 = vld [vmem:[#allocation5 + $0x158] sm:$0xff]
    %v249 = vld [vmem:[#allocation5 + $0x160] sm:$0xff]
    %v250 = vld [vmem:[#allocation5 + $0x168] sm:$0xff]
    %v251 = vld [vmem:[#allocation5 + $0x170] sm:$0xff]
    %v252 = vld [vmem:[#allocation5 + $0x178] sm:$0xff]
    %v253 = vld [vmem:[#allocation7 + $0x2] sm:$0x1]
    %v254 = vlaneseq
    %v255 = vshrl.u32 %v254, 7
    %v256 = vsub.s32 0, %v255
    %v257 = vrot.slane %v253, %v256
    %258 = vmatprep.subr.mxu0 0.0
    %259 = vmatpush1.msra.mxu0 %v237
    %260 = vmatprep.subr.mxu0 0.0
    %261 = vmatpush1.msra.mxu0 %v238
    %262 = vmatprep.subr.mxu0 0.0
    %263 = vmatpush1.msra.mxu0 %v239
    %264 = vmatprep.subr.mxu0 0.0
    %265 = vmatpush1.msra.mxu0 %v240
    %266 = vmatprep.subr.mxu0 0.0
    %267 = vmatpush1.msra.mxu0 %v241
    %268 = vmatprep.subr.mxu0 0.0
    %269 = vmatpush1.msra.mxu0 %v242
    %270 = vmatprep.subr.mxu0 0.0
    %271 = vmatpush1.msra.mxu0 %v243
    %272 = vmatprep.subr.mxu0 0.0
    %273 = vmatpush1.msra.mxu0 %v244
    %274 = vmatprep.subr.mxu0 0.0
    %275 = vmatpush1.msra.mxu0 %v245
    %276 = vmatprep.subr.mxu0 0.0
    %277 = vmatpush1.msra.mxu0 %v246
    %278 = vmatprep.subr.mxu0 0.0
    %279 = vmatpush1.msra.mxu0 %v247
    %280 = vmatprep.subr.mxu0 0.0
    %281 = vmatpush1.msra.mxu0 %v248
    %282 = vmatprep.subr.mxu0 0.0
    %283 = vmatpush1.msra.mxu0 %v249
    %284 = vmatprep.subr.mxu0 0.0
    %285 = vmatpush1.msra.mxu0 %v250
    %286 = vmatprep.subr.mxu0 0.0
    %287 = vmatpush1.msra.mxu0 %v251
    %288 = vmatprep.subr.mxu0 0.0
    %289 = vmatpush1.msra.mxu0 %v252
    %290 = vmatprep.subr.mxu0 0.0
    %291 = vmatpush1.msra.mxu0 0.0
    %292 = vmatprep.subr.mxu0 0.0
    %293 = vmatpush1.msra.mxu0 0.0
    %294 = vmatprep.subr.mxu0 0.0
    %295 = vmatpush1.msra.mxu0 0.0
    %296 = vmatprep.subr.mxu0 0.0
    %297 = vmatpush1.msra.mxu0 0.0
    %298 = vmatprep.subr.mxu0 0.0
    %299 = vmatpush1.msra.mxu0 0.0
    %300 = vmatprep.subr.mxu0 0.0
    %301 = vmatpush1.msra.mxu0 0.0
    %302 = vmatprep.subr.mxu0 0.0
    %303 = vmatpush1.msra.mxu0 0.0
    %304 = vmatprep.subr.mxu0 0.0
    %305 = vmatpush1.msra.mxu0 0.0
    %306 = vmatprep.subr.mxu0 0.0
    %307 = vmatpush1.msra.mxu0 0.0
    %308 = vmatprep.subr.mxu0 0.0
    %309 = vmatpush1.msra.mxu0 0.0
    %310 = vmatprep.subr.mxu0 0.0
    %311 = vmatpush1.msra.mxu0 0.0
    %312 = vmatprep.subr.mxu0 0.0
    %313 = vmatpush1.msra.mxu0 0.0
    %314 = vmatprep.subr.mxu0 0.0
    %315 = vmatpush1.msra.mxu0 0.0
    %316 = vmatprep.subr.mxu0 0.0
    %317 = vmatpush1.msra.mxu0 0.0
    %318 = vmatprep.subr.mxu0 0.0
    %319 = vmatpush1.msra.mxu0 0.0
    %320 = vmatprep.subr.mxu0 0.0
    %321 = vmatpush1.msra.mxu0 0.0
    %322 = vmatprep.mubr.f32.mxu0 0.0
    %323 = vmatmul.mubr.f32.gmra.mrb[0].mxu0 %v236
    %v324 = vpop.f32.mrb[0].mxu0
    %v325 = vadd.f32 %v257, %v324
    %v326 = vpop.f32.mrb[0].mxu0
    %327 = vdwg.mxu0
    %v328 = vtanh.pop %v325
    %v329 = vld [vmem:[#allocation5 + $0x180] sm:$0xff]
    %v330 = vld [vmem:[#allocation5 + $0x188] sm:$0xff]
    %v331 = vld [vmem:[#allocation5 + $0x190] sm:$0xff]
    %v332 = vld [vmem:[#allocation5 + $0x198] sm:$0xff]
    %v333 = vld [vmem:[#allocation5 + $0x1a0] sm:$0xff]
    %v334 = vld [vmem:[#allocation5 + $0x1a8] sm:$0xff]
    %v335 = vld [vmem:[#allocation5 + $0x1b0] sm:$0xff]
    %v336 = vld [vmem:[#allocation5 + $0x1b8] sm:$0xff]
    %v337 = vld [vmem:[#allocation5 + $0x1c0] sm:$0xff]
    %v338 = vld [vmem:[#allocation5 + $0x1c8] sm:$0xff]
    %v339 = vld [vmem:[#allocation5 + $0x1d0] sm:$0xff]
    %v340 = vld [vmem:[#allocation5 + $0x1d8] sm:$0xff]
    %v341 = vld [vmem:[#allocation5 + $0x1e0] sm:$0xff]
    %v342 = vld [vmem:[#allocation5 + $0x1e8] sm:$0xff]
    %v343 = vld [vmem:[#allocation5 + $0x1f0] sm:$0xff]
    %v344 = vld [vmem:[#allocation5 + $0x1f8] sm:$0xff]
    %v345 = vld [vmem:[#allocation7 + $0x3] sm:$0x1]
    %v346 = vlaneseq
    %v347 = vshrl.u32 %v346, 7
    %v348 = vsub.s32 0, %v347
    %v349 = vrot.slane %v345, %v348
    %350 = vmatprep.subr.mxu0 0.0
    %351 = vmatpush1.msra.mxu0 %v329
    %352 = vmatprep.subr.mxu0 0.0
    %353 = vmatpush1.msra.mxu0 %v330
    %354 = vmatprep.subr.mxu0 0.0
    %355 = vmatpush1.msra.mxu0 %v331
    %356 = vmatprep.subr.mxu0 0.0
    %357 = vmatpush1.msra.mxu0 %v332
    %358 = vmatprep.subr.mxu0 0.0
    %359 = vmatpush1.msra.mxu0 %v333
    %360 = vmatprep.subr.mxu0 0.0
    %361 = vmatpush1.msra.mxu0 %v334
    %362 = vmatprep.subr.mxu0 0.0
    %363 = vmatpush1.msra.mxu0 %v335
    %364 = vmatprep.subr.mxu0 0.0
    %365 = vmatpush1.msra.mxu0 %v336
    %366 = vmatprep.subr.mxu0 0.0
    %367 = vmatpush1.msra.mxu0 %v337
    %368 = vmatprep.subr.mxu0 0.0
    %369 = vmatpush1.msra.mxu0 %v338
    %370 = vmatprep.subr.mxu0 0.0
    %371 = vmatpush1.msra.mxu0 %v339
    %372 = vmatprep.subr.mxu0 0.0
    %373 = vmatpush1.msra.mxu0 %v340
    %374 = vmatprep.subr.mxu0 0.0
    %375 = vmatpush1.msra.mxu0 %v341
    %376 = vmatprep.subr.mxu0 0.0
    %377 = vmatpush1.msra.mxu0 %v342
    %378 = vmatprep.subr.mxu0 0.0
    %379 = vmatpush1.msra.mxu0 %v343
    %380 = vmatprep.subr.mxu0 0.0
    %381 = vmatpush1.msra.mxu0 %v344
    %382 = vmatprep.subr.mxu0 0.0
    %383 = vmatpush1.msra.mxu0 0.0
    %384 = vmatprep.subr.mxu0 0.0
    %385 = vmatpush1.msra.mxu0 0.0
    %386 = vmatprep.subr.mxu0 0.0
    %387 = vmatpush1.msra.mxu0 0.0
    %388 = vmatprep.subr.mxu0 0.0
    %389 = vmatpush1.msra.mxu0 0.0
    %390 = vmatprep.subr.mxu0 0.0
    %391 = vmatpush1.msra.mxu0 0.0
    %392 = vmatprep.subr.mxu0 0.0
    %393 = vmatpush1.msra.mxu0 0.0
    %394 = vmatprep.subr.mxu0 0.0
    %395 = vmatpush1.msra.mxu0 0.0
    %396 = vmatprep.subr.mxu0 0.0
    %397 = vmatpush1.msra.mxu0 0.0
    %398 = vmatprep.subr.mxu0 0.0
    %399 = vmatpush1.msra.mxu0 0.0
    %400 = vmatprep.subr.mxu0 0.0
    %401 = vmatpush1.msra.mxu0 0.0
    %402 = vmatprep.subr.mxu0 0.0
    %403 = vmatpush1.msra.mxu0 0.0
    %404 = vmatprep.subr.mxu0 0.0
    %405 = vmatpush1.msra.mxu0 0.0
    %406 = vmatprep.subr.mxu0 0.0
    %407 = vmatpush1.msra.mxu0 0.0
    %408 = vmatprep.subr.mxu0 0.0
    %409 = vmatpush1.msra.mxu0 0.0
    %410 = vmatprep.subr.mxu0 0.0
    %411 = vmatpush1.msra.mxu0 0.0
    %412 = vmatprep.subr.mxu0 0.0
    %413 = vmatpush1.msra.mxu0 0.0
    %414 = vmatprep.mubr.f32.mxu0 0.0
    %415 = vmatmul.mubr.f32.gmra.mrb[0].mxu0 %v328
    %v416 = vpop.f32.mrb[0].mxu0
    %v417 = vadd.f32 %v349, %v416
    %v418 = vpop.f32.mrb[0].mxu0
    %419 = vdwg.mxu0
    %420 = vst [vmem:[#allocation8] sm:$0xff] %v417
    // Predicated region
    $region26: #{tpu_custom_call.1} parent=1 // pred_check
      _
    $region27: #{tpu_custom_call.1} parent=1 // pred_check_branch
      %422 = sbr.rel (0) target = $region29
    $region28: #{tpu_custom_call.1} parent=1 // pred_region
      %s424 = ssub.s32 128, 128
      %425 = vsyncadd [#allocation4], %s424
      %s427 = sshll.u32 [#allocation8], 4
      %s428 = int_to_ptr.vmem [resolvable:$true] %s427
      %430 = dma.vmem_to_hbm [thread:$0]  %s428, 128, %s3, [#allocation4]
    $region29: #{tpu_custom_call.1} parent=1 // pred_fallthru
      _
    // Predicated region
    $region30: #{tpu_custom_call.1} parent=1 // pred_check
      _
    $region31: #{tpu_custom_call.1} parent=1 // pred_check_branch
      %432 = sbr.rel (0) target = $region33
    $region32: #{tpu_custom_call.1} parent=1 // pred_region
      %433 = dma.done [#allocation4], 128
    $region33: #{tpu_custom_call.1} parent=1 // pred_fallthru
      _
    %434 = vsyncpa [#allocation3], 1
    %435 = vsyncpa [#allocation6], 1
    %436 = vsyncpa [#allocation4], 1

</llo_original>
